<compile_context>
chip_gen: v6e
topology: v6e:2x2x1
jax: 0.10.0
libtpu: 0.0.40
codegen_flags: <defaults>
</compile_context>

<pallas_src>
import functools

import jax
import jax.numpy as jnp
from jax.experimental import pallas as pl
from jax.experimental.pallas import tpu as pltpu

H1 = 64     # first hidden width  (nn.Linear(input_dim, 64))
H2 = 8      # second hidden width (nn.Linear(64, 8))
H1P = 128   # lane-padded first hidden width (full vreg lane width)

_MAX_BLOCK_B = 1024     # upper bound on rows per grid step
_SINGLE_STEP_MAX = 256  # below this, one grid step (launch overhead dominates)


def _round_up(n, m):
    return ((n + m - 1) // m) * m


def _choose_block_b(b):
    """Batch rows per grid step.  Tiny B -> single step; large B -> big blocks
    but always >= 2 steps so v7x's two TensorCores both get work."""
    b8 = _round_up(max(b, 1), 8)
    if b8 <= _SINGLE_STEP_MAX:
        return b8
    half = _round_up((b8 + 1) // 2, 8)
    return min(_MAX_BLOCK_B, half)


def _mlp_kernel(x_ref, w1_ref, w23_ref, bias_ref, o_ref, *, output_dim, compact):
    out_lanes = w23_ref.shape[1]     # lane-dense padded logits width (>= 128)
    cdt = w23_ref.dtype              # dot-operand dtype (f32 default, bf16 opt-in)

    # layer 1: Linear(input_dim, 64) + ReLU  (W1 lives in cols [0:64] of a
    # 128-lane slab; padded lanes stay exactly 0 through the ReLU)
    h = jnp.dot(x_ref[...], w1_ref[...], preferred_element_type=jnp.float32)
    h = jnp.maximum(h + bias_ref[0:1, 0:H1P], 0.0)

    # layer 2: Linear(64, 8) + ReLU  (full-slab contraction over 128 rows;
    # rows >= 64 and cols >= 8 of the W2 slab are zero)
    h = jnp.dot(h.astype(cdt), w23_ref[0:H1P, :],
                preferred_element_type=jnp.float32)
    h = jnp.maximum(h + bias_ref[1:2, :], 0.0)

    # policy layer: Linear(8, output_dim) + Softmax.  The -inf lane mask for the
    # padded output lanes is baked into bias row 2 (W3's padded cols are zero).
    logits = jnp.dot(h.astype(cdt), w23_ref[H1P:H1P + out_lanes, :],
                     preferred_element_type=jnp.float32)
    logits = logits + bias_ref[2:3, :]

    m = jnp.max(logits, axis=-1, keepdims=True)
    e = jnp.exp(logits - m)
    denom = jnp.sum(e, axis=-1, keepdims=True)
    # exact reciprocal keeps sum-to-1 comfortably inside 1e-5
    p = e * pl.reciprocal(denom, approx=False)

    if compact:
        o_ref[...] = p[:, 0:output_dim].astype(o_ref.dtype)   # compact writeback
    else:
        o_ref[...] = p.astype(o_ref.dtype)                    # lane-dense padded


def init_params(key, input_dim, output_dim):
    """Deterministic init; weights stored as [in, out] (transpose of torch Linear)."""
    k1, k2, k3, k4, k5, k6 = jax.random.split(key, 6)

    def uniform_init(k, shape, fan_in):
        bound = 1.0 / jnp.sqrt(fan_in)
        return jax.random.uniform(k, shape, jnp.float32, -bound, bound)

    w1 = uniform_init(k1, (input_dim, H1), input_dim)
    b1 = uniform_init(k2, (1, H1), input_dim)
    w2 = uniform_init(k3, (H1, H2), H1)
    b2 = uniform_init(k4, (1, H2), H1)
    w3 = uniform_init(k5, (H2, output_dim), H2)
    b3 = uniform_init(k6, (1, output_dim), H2)
    return (w1, b1, w2, b2, w3, b3)


def pack_params(params, output_dim, dtype=jnp.float32):
    """Pack the 6 Linear parameters into 3 lane-dense slab operands (do once,
    keep on device).  dtype=jnp.bfloat16 is the large-batch v6e/v7x option;
    the bias/mask pack always stays f32."""
    w1, b1, w2, b2, w3, b3 = params
    input_dim = w1.shape[0]
    out_lanes = _round_up(max(output_dim, 1), 128)

    # W1 as a full 128-lane slab (cols >= 64 are zero).
    w1p = jnp.zeros((input_dim, H1P), jnp.float32)
    w1p = w1p.at[:, 0:H1].set(w1.astype(jnp.float32))

    # [W2 slab ; W3 slab] stacked along rows; all padding exactly zero.
    w23 = jnp.zeros((H1P + out_lanes, out_lanes), jnp.float32)
    w23 = w23.at[0:H1, 0:H2].set(w2.astype(jnp.float32))
    w23 = w23.at[H1P:H1P + H2, 0:output_dim].set(w3.astype(jnp.float32))

    # b1 / b2 / b3 in three rows of one buffer; row 2 carries the baked -inf
    # softmax mask for the padded output lanes.
    bias = jnp.zeros((3, out_lanes), jnp.float32)
    bias = bias.at[0, 0:H1].set(b1.reshape(-1).astype(jnp.float32))
    bias = bias.at[1, 0:H2].set(b2.reshape(-1).astype(jnp.float32))
    bias = bias.at[2, :].set(-jnp.inf)
    bias = bias.at[2, 0:output_dim].set(b3.reshape(-1).astype(jnp.float32))

    return (w1p.astype(dtype), w23.astype(dtype), bias)


def mlp_forward(x, packed, output_dim, *, compact_output=True):
    """x: (input_dim,) or (B, input_dim). Returns softmax policy of shape
    (B, output_dim) (B=1 for a single sample, matching torch's unsqueeze(0))."""
    w1p, w23, bias = packed
    x2d = jnp.atleast_2d(jnp.asarray(x, jnp.float32))      # unsqueeze(0) for 1-D input
    b, input_dim = x2d.shape
    out_lanes = _round_up(max(output_dim, 1), 128)

    block_b = _choose_block_b(b)
    b_pad = _round_up(b, block_b)
    nb = b_pad // block_b
    if b_pad != b:
        x2d = jnp.pad(x2d, ((0, b_pad - b), (0, 0)))
    x2d = x2d.astype(w1p.dtype)   # matches the pack dtype (f32 default, bf16 opt-in)

    out_cols = output_dim if compact_output else out_lanes
    kernel = functools.partial(_mlp_kernel, output_dim=output_dim,
                               compact=compact_output)
    out = pl.pallas_call(
        kernel,
        out_shape=jax.ShapeDtypeStruct((b_pad, out_cols), jnp.float32),
        grid=(nb,),
        in_specs=[
            pl.BlockSpec((block_b, input_dim), lambda i: (i, 0)),   # x tile per batch block
            pl.BlockSpec(w1p.shape, lambda i: (0, 0)),              # resident weight slabs
            pl.BlockSpec(w23.shape, lambda i: (0, 0)),
            pl.BlockSpec(bias.shape, lambda i: (0, 0)),
        ],
        out_specs=pl.BlockSpec((block_b, out_cols), lambda i: (i, 0)),
        compiler_params=pltpu.CompilerParams(
            dimension_semantics=("parallel",)),
    )(x2d, w1p, w23, bias)

    out = out[:b]
    if not compact_output:
        out = out[:, :output_dim]
    return out


def mlp_reference(x, params):
    w1, b1, w2, b2, w3, b3 = params
    h = jnp.atleast_2d(jnp.asarray(x, jnp.float32))
    h = jnp.maximum(h @ w1 + b1, 0.0)
    h = jnp.maximum(h @ w2 + b2, 0.0)
    logits = h @ w3 + b3
    return jax.nn.softmax(logits, axis=-1)


if __name__ == "__main__":
    input_dim = 32
    output_dim = 8

    key = jax.random.PRNGKey(0)
    kx, kb, kc, kp = jax.random.split(key, 4)
    params = init_params(kp, input_dim, output_dim)
    packed = jax.tree_util.tree_map(jax.block_until_ready,
                                    pack_params(params, output_dim))

    # Single-sample path (matches the PyTorch module's unsqueeze(0) semantics).
    x = jax.random.normal(kx, (input_dim,), dtype=jnp.float32)
    out = jax.block_until_ready(mlp_forward(x, packed, output_dim))
    ref = mlp_reference(x, params)
    assert out.shape == (1, output_dim)
    assert jnp.allclose(out, ref, atol=1e-5, rtol=1e-5)
    assert jnp.allclose(jnp.sum(out), 1.0, atol=1e-5)

    # Small batch, single grid step, compact output (default).
    xb = jax.random.normal(kb, (16, input_dim), dtype=jnp.float32)
    outb = jax.block_until_ready(mlp_forward(xb, packed, output_dim))
    refb = mlp_reference(xb, params)
    assert outb.shape == (16, output_dim)
    assert jnp.allclose(outb, refb, atol=1e-5, rtol=1e-5)
    assert jnp.allclose(jnp.sum(outb, axis=-1), jnp.ones(16), atol=1e-5)

    # Lane-dense padded-output variant (the sweepable alternative writeback).
    outb2 = jax.block_until_ready(
        mlp_forward(xb, packed, output_dim, compact_output=False))
    assert outb2.shape == (16, output_dim)
    assert jnp.allclose(outb2, refb, atol=1e-5, rtol=1e-5)

    # Larger batch: exercises the multi-step "parallel" grid (both v7x TCs)
    # and the batch-padding path.
    xc = jax.random.normal(kc, (300, input_dim), dtype=jnp.float32)
    outc = jax.block_until_ready(mlp_forward(xc, packed, output_dim))
    refc = mlp_reference(xc, params)
    assert outc.shape == (300, output_dim)
    assert jnp.allclose(outc, refc, atol=1e-5, rtol=1e-5)
    assert jnp.allclose(jnp.sum(outc, axis=-1), jnp.ones(300), atol=1e-5)

    print("KERNEL_OK")
</pallas_src>

<mosaic_0001>
module attributes {stable_mosaic.version = 11 : i64} {
  func.func @_mlp_kernel(%arg0: i32, %arg1: memref<8x32xf32, #tpu.memory_space<vmem>>, %arg2: memref<32x128xf32, #tpu.memory_space<vmem>>, %arg3: memref<256x128xf32, #tpu.memory_space<vmem>>, %arg4: memref<3x128xf32, #tpu.memory_space<vmem>>, %arg5: memref<8x8xf32, #tpu.memory_space<vmem>>) attributes {dimension_semantics = [#tpu.dimension_semantics<parallel>], iteration_bounds = array<i64: 1>, scalar_prefetch = 0 : i64, scratch_operands = 0 : i64, tpu.core_type = #tpu.core_type<tc>, window_params = [{transform_indices = @transform_0, window_bounds = array<i64: 8, 32>}, {pipeline_mode = #tpu.pipeline_mode<synchronous>, transform_indices = @transform_1, window_bounds = array<i64: 32, 128>}, {pipeline_mode = #tpu.pipeline_mode<synchronous>, transform_indices = @transform_2, window_bounds = array<i64: 256, 128>}, {pipeline_mode = #tpu.pipeline_mode<synchronous>, transform_indices = @transform_3, window_bounds = array<i64: 3, 128>}, {transform_indices = @transform_4, window_bounds = array<i64: 8, 8>}]} {
    %c0 = arith.constant 0 : index
    %c0_0 = arith.constant 0 : index
    %0 = vector.load %arg1[%c0, %c0_0] : memref<8x32xf32, #tpu.memory_space<vmem>>, vector<8x32xf32>
    %c0_1 = arith.constant 0 : index
    %c0_2 = arith.constant 0 : index
    %1 = vector.load %arg2[%c0_1, %c0_2] : memref<32x128xf32, #tpu.memory_space<vmem>>, vector<32x128xf32>
    %cst = arith.constant dense<0.000000e+00> : vector<8x128xf32>
    %2 = tpu.matmul %0, %1, %cst {dimension_numbers = #tpu.dot_dimension_numbers<[1], [0], [0], [1], [0, 0, 1, 1], [], []>} : vector<8x32xf32>, vector<32x128xf32>, vector<8x128xf32> -> vector<8x128xf32>
    %c0_3 = arith.constant 0 : index
    %c0_4 = arith.constant 0 : index
    %3 = vector.load %arg4[%c0_3, %c0_4] : memref<3x128xf32, #tpu.memory_space<vmem>>, vector<1x128xf32>
    %4 = vector.broadcast %3 : vector<1x128xf32> to vector<8x128xf32>
    %5 = arith.addf %2, %4 : vector<8x128xf32>
    %cst_5 = arith.constant 0.000000e+00 : f32
    %6 = vector.broadcast %cst_5 : f32 to vector<8x128xf32>
    %7 = arith.maximumf %5, %6 : vector<8x128xf32>
    %c0_6 = arith.constant 0 : index
    %c0_7 = arith.constant 0 : index
    %8 = vector.load %arg3[%c0_6, %c0_7] : memref<256x128xf32, #tpu.memory_space<vmem>>, vector<128x128xf32>
    %cst_8 = arith.constant dense<0.000000e+00> : vector<8x128xf32>
    %9 = tpu.matmul %7, %8, %cst_8 {dimension_numbers = #tpu.dot_dimension_numbers<[1], [0], [0], [1], [0, 0, 1, 1], [], []>} : vector<8x128xf32>, vector<128x128xf32>, vector<8x128xf32> -> vector<8x128xf32>
    %c1 = arith.constant 1 : index
    %c0_9 = arith.constant 0 : index
    %10 = vector.load %arg4[%c1, %c0_9] : memref<3x128xf32, #tpu.memory_space<vmem>>, vector<1x128xf32>
    %11 = vector.broadcast %10 : vector<1x128xf32> to vector<8x128xf32>
    %12 = arith.addf %9, %11 : vector<8x128xf32>
    %cst_10 = arith.constant 0.000000e+00 : f32
    %13 = vector.broadcast %cst_10 : f32 to vector<8x128xf32>
    %14 = arith.maximumf %12, %13 : vector<8x128xf32>
    %c128 = arith.constant 128 : index
    %c0_11 = arith.constant 0 : index
    %15 = vector.load %arg3[%c128, %c0_11] : memref<256x128xf32, #tpu.memory_space<vmem>>, vector<128x128xf32>
    %cst_12 = arith.constant dense<0.000000e+00> : vector<8x128xf32>
    %16 = tpu.matmul %14, %15, %cst_12 {dimension_numbers = #tpu.dot_dimension_numbers<[1], [0], [0], [1], [0, 0, 1, 1], [], []>} : vector<8x128xf32>, vector<128x128xf32>, vector<8x128xf32> -> vector<8x128xf32>
    %c2 = arith.constant 2 : index
    %c0_13 = arith.constant 0 : index
    %17 = vector.load %arg4[%c2, %c0_13] : memref<3x128xf32, #tpu.memory_space<vmem>>, vector<1x128xf32>
    %18 = vector.broadcast %17 : vector<1x128xf32> to vector<8x128xf32>
    %19 = arith.addf %16, %18 : vector<8x128xf32>
    %cst_14 = arith.constant dense<0xFF800000> : vector<8xf32>
    %20 = vector.multi_reduction <maximumf>, %19, %cst_14 [1] : vector<8x128xf32> to vector<8xf32>
    %21 = vector.shape_cast %20 : vector<8xf32> to vector<8x1xf32>
    %22 = vector.broadcast %21 : vector<8x1xf32> to vector<8x128xf32>
    %23 = arith.subf %19, %22 : vector<8x128xf32>
    %24 = math.exp %23 : vector<8x128xf32>
    %cst_15 = arith.constant dense<0.000000e+00> : vector<8xf32>
    %25 = vector.multi_reduction <add>, %24, %cst_15 [1] : vector<8x128xf32> to vector<8xf32>
    %26 = vector.shape_cast %25 : vector<8xf32> to vector<8x1xf32>
    %27 = tpu.reciprocal %26 : vector<8x1xf32> -> vector<8x1xf32>
    %28 = vector.broadcast %27 : vector<8x1xf32> to vector<8x128xf32>
    %29 = arith.mulf %24, %28 : vector<8x128xf32>
    %30 = vector.extract_strided_slice %29 {offsets = [0, 0], sizes = [8, 8], strides = [1, 1]} : vector<8x128xf32> to vector<8x8xf32>
    %c0_16 = arith.constant 0 : index
    %c0_17 = arith.constant 0 : index
    %31 = vector.load %arg5[%c0_16, %c0_17] : memref<8x8xf32, #tpu.memory_space<vmem>>, vector<8x8xf32>
    tpu.vector_store %arg5[%c0_16, %c0_17], %30 {strides = array<i32>} : memref<8x8xf32, #tpu.memory_space<vmem>>, vector<8x8xf32>,
    return
  }
  func.func @transform_0(%arg0: i32) -> (i32, i32) {
    %c0_i32 = arith.constant 0 : i32
    %c0_i32_0 = arith.constant 0 : i32
    return %arg0, %c0_i32 : i32, i32
  }
  func.func @transform_1(%arg0: i32) -> (i32, i32) {
    %c0_i32 = arith.constant 0 : i32
    %c0_i32_0 = arith.constant 0 : i32
    %c0_i32_1 = arith.constant 0 : i32
    return %c0_i32, %c0_i32_0 : i32, i32
  }
  func.func @transform_2(%arg0: i32) -> (i32, i32) {
    %c0_i32 = arith.constant 0 : i32
    %c0_i32_0 = arith.constant 0 : i32
    %c0_i32_1 = arith.constant 0 : i32
    return %c0_i32, %c0_i32_0 : i32, i32
  }
  func.func @transform_3(%arg0: i32) -> (i32, i32) {
    %c0_i32 = arith.constant 0 : i32
    %c0_i32_0 = arith.constant 0 : i32
    %c0_i32_1 = arith.constant 0 : i32
    return %c0_i32, %c0_i32_0 : i32, i32
  }
  func.func @transform_4(%arg0: i32) -> (i32, i32) {
    %c0_i32 = arith.constant 0 : i32
    %c0_i32_0 = arith.constant 0 : i32
    return %arg0, %c0_i32 : i32, i32
  }
}

</mosaic_0001>

<llo_original>
// kernel: tpu_custom_call.1
$region0: #{tpu_custom_call.1}
  #allocation0 [shape = 'u32[]', space=smem, size = 0x4, offset = 0x4, fixed_abs, tag = 'smem constant byte address 0x4 - core index']
  #allocation1 [shape = 'u32[144,128]{1,0:T(1,128)}', space=vmem, size = 0x12000, scoped, tag = 'internal scratch']
  %s0 = inlined_call_operand.hbm [shape: f32[8,32], index: 0, kind: input, shape index: {}]
  %s1 = inlined_call_operand.hbm [shape: f32[32,128], index: 1, kind: input, shape index: {}]
  %s2 = inlined_call_operand.hbm [shape: f32[256,128], index: 2, kind: input, shape index: {}]
  %s3 = inlined_call_operand.vmem [shape: f32[3,128], index: 3, kind: input, shape index: {}]
  %s4 = inlined_call_operand.hbm [shape: f32[8,8], index: 4, kind: output, shape index: {}]
  %s5 = sld [smem:[#allocation0]]
  $region38: #{tpu_custom_call.1} parent=0
    _
  %s7 = ssub.s32 1, %s5
  %s8 = scalar_select 0, %s7, %s5
  $region1: #{tpu_custom_call.1} parent=0
    #allocation2 [shape = 'u8[4096]{0}', space=vmem, size = 0x1000, scoped, tag = 'input window, operand 0, single buffered']
    #allocation3 [shape = 's32[1]{0}', space=sflag, size = 0x4, scoped, tag = 'scoped memory for tpu_custom_call.1']
    #allocation4 [shape = 's32[1]{0}', space=sflag, size = 0x4, scoped, tag = 'scoped memory for tpu_custom_call.1']
    #allocation5 [shape = 'u8[16384]{0}', space=vmem, size = 0x4000, scoped, tag = 'input window, operand 1, single buffered']
    #allocation6 [shape = 's32[1]{0}', space=sflag, size = 0x4, scoped, tag = 'scoped memory for tpu_custom_call.1']
    #allocation7 [shape = 'u8[131072]{0}', space=vmem, size = 0x20000, scoped, tag = 'input window, operand 2, single buffered']
    #allocation8 [shape = 'u8[4096]{0}', space=vmem, size = 0x1000, scoped, tag = 'output window, operand 0, single buffered']
    %9 = vsyncpa [#allocation3], 0
    %10 = vsyncpa [#allocation6], 0
    %11 = vsyncpa [#allocation4], 0
    // Predicated region
    $region2: #{tpu_custom_call.1} parent=1 // pred_check
      _
    $region3: #{tpu_custom_call.1} parent=1 // pred_check_branch
      %13 = sbr.rel (0) target = $region5
    $region4: #{tpu_custom_call.1} parent=1 // pred_region
      %s15 = ssub.s32 128, 128
      %16 = vsyncadd [#allocation3], %s15
      %s18 = sshll.u32 [#allocation2], 4
      %s19 = int_to_ptr.vmem [resolvable:$true] %s18
      %21 = dma.hbm_to_vmem [thread:$0]  %s0, 128, %s19, [#allocation3]
    $region5: #{tpu_custom_call.1} parent=1 // pred_fallthru
      _
    // Predicated region
    $region6: #{tpu_custom_call.1} parent=1 // pred_check
      _
    $region7: #{tpu_custom_call.1} parent=1 // pred_check_branch
      %23 = sbr.rel (0) target = $region9
    $region8: #{tpu_custom_call.1} parent=1 // pred_region
      %s25 = ssub.s32 512, 512
      %26 = vsyncadd [#allocation6], %s25
      %s27 = sshll.u32 [#allocation5], 4
      %s28 = int_to_ptr.vmem [resolvable:$true] %s27
      %33 = dma.hbm_to_vmem [thread:$0]  %s1, 512, %s28, [#allocation6], 128, 128, 8
    $region9: #{tpu_custom_call.1} parent=1 // pred_fallthru
      _
    // Predicated region
    $region10: #{tpu_custom_call.1} parent=1 // pred_check
      _
    $region11: #{tpu_custom_call.1} parent=1 // pred_check_branch
      %35 = sbr.rel (0) target = $region13
    $region12: #{tpu_custom_call.1} parent=1 // pred_region
      %s37 = ssub.s32 4096, 4096
      %38 = vsyncadd [#allocation6], %s37
      %s39 = sshll.u32 [#allocation7], 4
      %s40 = int_to_ptr.vmem [resolvable:$true] %s39
      %45 = dma.hbm_to_vmem [thread:$0]  %s2, 4096, %s40, [#allocation6], 128, 128, 8
    $region13: #{tpu_custom_call.1} parent=1 // pred_fallthru
      _
    // Predicated region
    $region14: #{tpu_custom_call.1} parent=1 // pred_check
      _
    $region15: #{tpu_custom_call.1} parent=1 // pred_check_branch
      %47 = sbr.rel (0) target = $region17
    $region16: #{tpu_custom_call.1} parent=1 // pred_region
      _
    $region17: #{tpu_custom_call.1} parent=1 // pred_fallthru
      _
    // Predicated region
    $region18: #{tpu_custom_call.1} parent=1 // pred_check
      _
    $region19: #{tpu_custom_call.1} parent=1 // pred_check_branch
      %49 = sbr.rel (0) target = $region21
    $region20: #{tpu_custom_call.1} parent=1 // pred_region
      %50 = dma.done [#allocation3], 128
    $region21: #{tpu_custom_call.1} parent=1 // pred_fallthru
      _
    // Predicated region
    $region22: #{tpu_custom_call.1} parent=1 // pred_check
      _
    $region23: #{tpu_custom_call.1} parent=1 // pred_check_branch
      %52 = sbr.rel (0) target = $region25
    $region24: #{tpu_custom_call.1} parent=1 // pred_region
      %53 = dma.done [#allocation6], 512
    $region25: #{tpu_custom_call.1} parent=1 // pred_fallthru
      _
    // Predicated region
    $region26: #{tpu_custom_call.1} parent=1 // pred_check
      _
    $region27: #{tpu_custom_call.1} parent=1 // pred_check_branch
      %55 = sbr.rel (0) target = $region29
    $region28: #{tpu_custom_call.1} parent=1 // pred_region
      %56 = dma.done [#allocation6], 4096
    $region29: #{tpu_custom_call.1} parent=1 // pred_fallthru
      _
    %v57 = vld [vmem:[#allocation2] sm:$0xff]
    %v58 = vld [vmem:[#allocation5] sm:$0xff]
    %v59 = vld [vmem:[#allocation5 + $0x8] sm:$0xff]
    %v60 = vld [vmem:[#allocation5 + $0x10] sm:$0xff]
    %v61 = vld [vmem:[#allocation5 + $0x18] sm:$0xff]
    %v62 = vld [vmem:[%s3] sm:$0x1]
    %v63 = vlaneseq
    %v64 = vshrl.u32 %v63, 7
    %v65 = vsub.s32 0, %v64
    %v66 = vrot.slane %v62, %v65
    %vm67 = vcmask 261120
    %v69 = vsel %vm67, %v57, 0
    %71 = vmatprep.subr.mxu0 0.0
    %72 = vmatpush1.msra.mxu0 0.0
    %73 = vmatprep.subr.mxu0 0.0
    %74 = vmatpush1.msra.mxu0 0.0
    %75 = vmatprep.subr.mxu0 0.0
    %76 = vmatpush1.msra.mxu0 0.0
    %77 = vmatprep.subr.mxu0 0.0
    %78 = vmatpush1.msra.mxu0 0.0
    %79 = vmatprep.subr.mxu0 0.0
    %80 = vmatpush1.msra.mxu0 0.0
    %81 = vmatprep.subr.mxu0 0.0
    %82 = vmatpush1.msra.mxu0 0.0
    %83 = vmatprep.subr.mxu0 0.0
    %84 = vmatpush1.msra.mxu0 0.0
    %85 = vmatprep.subr.mxu0 0.0
    %86 = vmatpush1.msra.mxu0 0.0
    %87 = vmatprep.subr.mxu0 0.0
    %88 = vmatpush1.msra.mxu0 0.0
    %89 = vmatprep.subr.mxu0 0.0
    %90 = vmatpush1.msra.mxu0 0.0
    %91 = vmatprep.subr.mxu0 0.0
    %92 = vmatpush1.msra.mxu0 0.0
    %93 = vmatprep.subr.mxu0 0.0
    %94 = vmatpush1.msra.mxu0 0.0
    %95 = vmatprep.subr.mxu0 0.0
    %96 = vmatpush1.msra.mxu0 %v61
    %97 = vmatprep.subr.mxu0 0.0
    %98 = vmatpush1.msra.mxu0 %v60
    %99 = vmatprep.subr.mxu0 0.0
    %100 = vmatpush1.msra.mxu0 %v59
    %101 = vmatprep.subr.mxu0 0.0
    %102 = vmatpush1.msra.mxu0 %v58
    %103 = vmatprep.subr.mxu0 0.0
    %104 = vmatpush2.msra.mxu0 0.0
    %105 = vmatprep.subr.mxu0 0.0
    %106 = vmatpush2.msra.mxu0 0.0
    %107 = vmatprep.subr.mxu0 0.0
    %108 = vmatpush2.msra.mxu0 0.0
    %109 = vmatprep.subr.mxu0 0.0
    %110 = vmatpush2.msra.mxu0 0.0
    %111 = vmatprep.subr.mxu0 0.0
    %112 = vmatpush2.msra.mxu0 0.0
    %113 = vmatprep.subr.mxu0 0.0
    %114 = vmatpush2.msra.mxu0 0.0
    %115 = vmatprep.subr.mxu0 0.0
    %116 = vmatpush2.msra.mxu0 0.0
    %117 = vmatprep.subr.mxu0 0.0
    %118 = vmatpush2.msra.mxu0 0.0
    %119 = vmatprep.subr.mxu0 0.0
    %120 = vmatpush2.msra.mxu0 0.0
    %121 = vmatprep.subr.mxu0 0.0
    %122 = vmatpush2.msra.mxu0 0.0
    %123 = vmatprep.subr.mxu0 0.0
    %124 = vmatpush2.msra.mxu0 0.0
    %125 = vmatprep.subr.mxu0 0.0
    %126 = vmatpush2.msra.mxu0 0.0
    %127 = vmatprep.subr.mxu0 0.0
    %128 = vmatpush2.msra.mxu0 0.0
    %129 = vmatprep.subr.mxu0 0.0
    %130 = vmatpush2.msra.mxu0 0.0
    %131 = vmatprep.subr.mxu0 0.0
    %132 = vmatpush2.msra.mxu0 0.0
    %133 = vmatprep.subr.mxu0 0.0
    %134 = vmatpush2.msra.mxu0 0.0
    %135 = vmatprep.mubr.f32.mxu0 0.0
    %136 = vmatmul.mubr.f32.gmra.mxu0 %v69
    %v137 = vpop.f32.mrf.mxu0
    %v138 = vadd.f32 %v66, %v137
    %v139 = vpop.f32.mrf.mxu0
    %140 = vdwg.mxu0
    %v141 = vmax.f32 %v138, 0.0
    %v142 = vld [vmem:[#allocation7] sm:$0xff]
    %v143 = vld [vmem:[#allocation7 + $0x8] sm:$0xff]
    %v144 = vld [vmem:[#allocation7 + $0x10] sm:$0xff]
    %v145 = vld [vmem:[#allocation7 + $0x18] sm:$0xff]
    %v146 = vld [vmem:[#allocation7 + $0x20] sm:$0xff]
    %v147 = vld [vmem:[#allocation7 + $0x28] sm:$0xff]
    %v148 = vld [vmem:[#allocation7 + $0x30] sm:$0xff]
    %v149 = vld [vmem:[#allocation7 + $0x38] sm:$0xff]
    %v150 = vld [vmem:[#allocation7 + $0x40] sm:$0xff]
    %v151 = vld [vmem:[#allocation7 + $0x48] sm:$0xff]
    %v152 = vld [vmem:[#allocation7 + $0x50] sm:$0xff]
    %v153 = vld [vmem:[#allocation7 + $0x58] sm:$0xff]
    %v154 = vld [vmem:[#allocation7 + $0x60] sm:$0xff]
    %v155 = vld [vmem:[#allocation7 + $0x68] sm:$0xff]
    %v156 = vld [vmem:[#allocation7 + $0x70] sm:$0xff]
    %v157 = vld [vmem:[#allocation7 + $0x78] sm:$0xff]
    %v158 = vld [vmem:[%s3 + $0x1] sm:$0x1]
    %v159 = vlaneseq
    %v160 = vshrl.u32 %v159, 7
    %v161 = vsub.s32 0, %v160
    %v162 = vrot.slane %v158, %v161
    %163 = vmatprep.subr.mxu0 0.0
    %164 = vmatpush1.msra.mxu0 %v157
    %165 = vmatprep.subr.mxu0 0.0
    %166 = vmatpush1.msra.mxu0 %v156
    %167 = vmatprep.subr.mxu0 0.0
    %168 = vmatpush1.msra.mxu0 %v155
    %169 = vmatprep.subr.mxu0 0.0
    %170 = vmatpush1.msra.mxu0 %v154
    %171 = vmatprep.subr.mxu0 0.0
    %172 = vmatpush1.msra.mxu0 %v153
    %173 = vmatprep.subr.mxu0 0.0
    %174 = vmatpush1.msra.mxu0 %v152
    %175 = vmatprep.subr.mxu0 0.0
    %176 = vmatpush1.msra.mxu0 %v151
    %177 = vmatprep.subr.mxu0 0.0
    %178 = vmatpush1.msra.mxu0 %v150
    %179 = vmatprep.subr.mxu0 0.0
    %180 = vmatpush1.msra.mxu0 %v149
    %181 = vmatprep.subr.mxu0 0.0
    %182 = vmatpush1.msra.mxu0 %v148
    %183 = vmatprep.subr.mxu0 0.0
    %184 = vmatpush1.msra.mxu0 %v147
    %185 = vmatprep.subr.mxu0 0.0
    %186 = vmatpush1.msra.mxu0 %v146
    %187 = vmatprep.subr.mxu0 0.0
    %188 = vmatpush1.msra.mxu0 %v145
    %189 = vmatprep.subr.mxu0 0.0
    %190 = vmatpush1.msra.mxu0 %v144
    %191 = vmatprep.subr.mxu0 0.0
    %192 = vmatpush1.msra.mxu0 %v143
    %193 = vmatprep.subr.mxu0 0.0
    %194 = vmatpush1.msra.mxu0 %v142
    %195 = vmatprep.subr.mxu0 0.0
    %196 = vmatpush2.msra.mxu0 0.0
    %197 = vmatprep.subr.mxu0 0.0
    %198 = vmatpush2.msra.mxu0 0.0
    %199 = vmatprep.subr.mxu0 0.0
    %200 = vmatpush2.msra.mxu0 0.0
    %201 = vmatprep.subr.mxu0 0.0
    %202 = vmatpush2.msra.mxu0 0.0
    %203 = vmatprep.subr.mxu0 0.0
    %204 = vmatpush2.msra.mxu0 0.0
    %205 = vmatprep.subr.mxu0 0.0
    %206 = vmatpush2.msra.mxu0 0.0
    %207 = vmatprep.subr.mxu0 0.0
    %208 = vmatpush2.msra.mxu0 0.0
    %209 = vmatprep.subr.mxu0 0.0
    %210 = vmatpush2.msra.mxu0 0.0
    %211 = vmatprep.subr.mxu0 0.0
    %212 = vmatpush2.msra.mxu0 0.0
    %213 = vmatprep.subr.mxu0 0.0
    %214 = vmatpush2.msra.mxu0 0.0
    %215 = vmatprep.subr.mxu0 0.0
    %216 = vmatpush2.msra.mxu0 0.0
    %217 = vmatprep.subr.mxu0 0.0
    %218 = vmatpush2.msra.mxu0 0.0
    %219 = vmatprep.subr.mxu0 0.0
    %220 = vmatpush2.msra.mxu0 0.0
    %221 = vmatprep.subr.mxu0 0.0
    %222 = vmatpush2.msra.mxu0 0.0
    %223 = vmatprep.subr.mxu0 0.0
    %224 = vmatpush2.msra.mxu0 0.0
    %225 = vmatprep.subr.mxu0 0.0
    %226 = vmatpush2.msra.mxu0 0.0
    %227 = vmatprep.mubr.f32.mxu0 0.0
    %228 = vmatmul.mubr.f32.gmra.mxu0 %v141
    %v229 = vpop.f32.mrf.mxu0
    %v230 = vadd.f32 %v162, %v229
    %v231 = vpop.f32.mrf.mxu0
    %232 = vdwg.mxu0
    %v233 = vmax.f32 %v230, 0.0
    %v234 = vld [vmem:[#allocation7 + $0x80] sm:$0xff]
    %v235 = vld [vmem:[#allocation7 + $0x88] sm:$0xff]
    %v236 = vld [vmem:[#allocation7 + $0x90] sm:$0xff]
    %v237 = vld [vmem:[#allocation7 + $0x98] sm:$0xff]
    %v238 = vld [vmem:[#allocation7 + $0xa0] sm:$0xff]
    %v239 = vld [vmem:[#allocation7 + $0xa8] sm:$0xff]
    %v240 = vld [vmem:[#allocation7 + $0xb0] sm:$0xff]
    %v241 = vld [vmem:[#allocation7 + $0xb8] sm:$0xff]
    %v242 = vld [vmem:[#allocation7 + $0xc0] sm:$0xff]
    %v243 = vld [vmem:[#allocation7 + $0xc8] sm:$0xff]
    %v244 = vld [vmem:[#allocation7 + $0xd0] sm:$0xff]
    %v245 = vld [vmem:[#allocation7 + $0xd8] sm:$0xff]
    %v246 = vld [vmem:[#allocation7 + $0xe0] sm:$0xff]
    %v247 = vld [vmem:[#allocation7 + $0xe8] sm:$0xff]
    %v248 = vld [vmem:[#allocation7 + $0xf0] sm:$0xff]
    %v249 = vld [vmem:[#allocation7 + $0xf8] sm:$0xff]
    %v250 = vld [vmem:[%s3 + $0x2] sm:$0x1]
    %v251 = vlaneseq
    %v252 = vshrl.u32 %v251, 7
    %v253 = vsub.s32 0, %v252
    %v254 = vrot.slane %v250, %v253
    %255 = vmatprep.subr.mxu0 0.0
    %256 = vmatpush1.msra.mxu0 %v249
    %257 = vmatprep.subr.mxu0 0.0
    %258 = vmatpush1.msra.mxu0 %v248
    %259 = vmatprep.subr.mxu0 0.0
    %260 = vmatpush1.msra.mxu0 %v247
    %261 = vmatprep.subr.mxu0 0.0
    %262 = vmatpush1.msra.mxu0 %v246
    %263 = vmatprep.subr.mxu0 0.0
    %264 = vmatpush1.msra.mxu0 %v245
    %265 = vmatprep.subr.mxu0 0.0
    %266 = vmatpush1.msra.mxu0 %v244
    %267 = vmatprep.subr.mxu0 0.0
    %268 = vmatpush1.msra.mxu0 %v243
    %269 = vmatprep.subr.mxu0 0.0
    %270 = vmatpush1.msra.mxu0 %v242
    %271 = vmatprep.subr.mxu0 0.0
    %272 = vmatpush1.msra.mxu0 %v241
    %273 = vmatprep.subr.mxu0 0.0
    %274 = vmatpush1.msra.mxu0 %v240
    %275 = vmatprep.subr.mxu0 0.0
    %276 = vmatpush1.msra.mxu0 %v239
    %277 = vmatprep.subr.mxu0 0.0
    %278 = vmatpush1.msra.mxu0 %v238
    %279 = vmatprep.subr.mxu0 0.0
    %280 = vmatpush1.msra.mxu0 %v237
    %281 = vmatprep.subr.mxu0 0.0
    %282 = vmatpush1.msra.mxu0 %v236
    %283 = vmatprep.subr.mxu0 0.0
    %284 = vmatpush1.msra.mxu0 %v235
    %285 = vmatprep.subr.mxu0 0.0
    %286 = vmatpush1.msra.mxu0 %v234
    %287 = vmatprep.subr.mxu0 0.0
    %288 = vmatpush2.msra.mxu0 0.0
    %289 = vmatprep.subr.mxu0 0.0
    %290 = vmatpush2.msra.mxu0 0.0
    %291 = vmatprep.subr.mxu0 0.0
    %292 = vmatpush2.msra.mxu0 0.0
    %293 = vmatprep.subr.mxu0 0.0
    %294 = vmatpush2.msra.mxu0 0.0
    %295 = vmatprep.subr.mxu0 0.0
    %296 = vmatpush2.msra.mxu0 0.0
    %297 = vmatprep.subr.mxu0 0.0
    %298 = vmatpush2.msra.mxu0 0.0
    %299 = vmatprep.subr.mxu0 0.0
    %300 = vmatpush2.msra.mxu0 0.0
    %301 = vmatprep.subr.mxu0 0.0
    %302 = vmatpush2.msra.mxu0 0.0
    %303 = vmatprep.subr.mxu0 0.0
    %304 = vmatpush2.msra.mxu0 0.0
    %305 = vmatprep.subr.mxu0 0.0
    %306 = vmatpush2.msra.mxu0 0.0
    %307 = vmatprep.subr.mxu0 0.0
    %308 = vmatpush2.msra.mxu0 0.0
    %309 = vmatprep.subr.mxu0 0.0
    %310 = vmatpush2.msra.mxu0 0.0
    %311 = vmatprep.subr.mxu0 0.0
    %312 = vmatpush2.msra.mxu0 0.0
    %313 = vmatprep.subr.mxu0 0.0
    %314 = vmatpush2.msra.mxu0 0.0
    %315 = vmatprep.subr.mxu0 0.0
    %316 = vmatpush2.msra.mxu0 0.0
    %317 = vmatprep.subr.mxu0 0.0
    %318 = vmatpush2.msra.mxu0 0.0
    %319 = vmatprep.mubr.f32.mxu0 0.0
    %320 = vmatmul.mubr.f32.gmra.mxu0 %v233
    %v321 = vpop.f32.mrf.mxu0
    %v322 = vadd.f32 %v254, %v321
    %v323 = vpop.f32.mrf.mxu0
    %324 = vdwg.mxu0
    %325 = vmax.xlane.f32.xlu0 %v322
    %v326 = vpop.xlane.xlu0 %325
    %v327 = vsub.f32 %v322, %v326
    %v328 = vmul.f32 %v327, 1.442695
    %v329 = vpow.pop %v328
    %330 = vadd.xlane.f32.xlu0 %v329
    %v331 = vpop.xlane.xlu0 %330
    %v332 = vrcp.pop %v331
    %v333 = vmul.f32 %v329, %v332
    %vm334 = vcmask 64512
    %335 = vst.msk [vmem:[#allocation8] sm:$0xff] %vm334, %v333
    // Predicated region
    $region30: #{tpu_custom_call.1} parent=1 // pred_check
      _
    $region31: #{tpu_custom_call.1} parent=1 // pred_check_branch
      %337 = sbr.rel (0) target = $region33
    $region32: #{tpu_custom_call.1} parent=1 // pred_region
      %s339 = ssub.s32 128, 128
      %340 = vsyncadd [#allocation4], %s339
      %s342 = sshll.u32 [#allocation8], 4
      %s343 = int_to_ptr.vmem [resolvable:$true] %s342
      %345 = dma.vmem_to_hbm [thread:$0]  %s343, 128, %s4, [#allocation4]
    $region33: #{tpu_custom_call.1} parent=1 // pred_fallthru
      _
    // Predicated region
    $region34: #{tpu_custom_call.1} parent=1 // pred_check
      _
    $region35: #{tpu_custom_call.1} parent=1 // pred_check_branch
      %347 = sbr.rel (0) target = $region37
    $region36: #{tpu_custom_call.1} parent=1 // pred_region
      %348 = dma.done [#allocation4], 128
    $region37: #{tpu_custom_call.1} parent=1 // pred_fallthru
      _
    %349 = vsyncpa [#allocation3], 1
    %350 = vsyncpa [#allocation6], 1
    %351 = vsyncpa [#allocation4], 1

</llo_original>
